<compile_context>
chip_gen: v7x
topology: tpu7x:2x2x1
jax: 0.10.0
libtpu: 0.0.40
codegen_flags: <defaults>
</compile_context>

<pallas_src>
import functools

import jax
import jax.numpy as jnp
from jax import lax
from jax.experimental import pallas as pl
from jax.experimental.pallas import tpu as pltpu


_LANE = 128
_T_TILE_MAX = 8192                       # bounds the unrolled chunk loop (<=64 chunks)
_VMEM_INPUT_BUDGET = 24 * 1024 * 1024    # double-buffered input blocks, all generations
_VMEM_LIMIT_BYTES = 32 * 1024 * 1024     # raise v5e's 16 MiB scoped default; < v7x physical


def _sublane_multiple(dtype):
    # Packed sublane tiling requirement: f32 -> 8, bf16/f16 -> 16, int8 -> 32.
    return max(8, 32 // jnp.dtype(dtype).itemsize)


def _round_up(x, m):
    return ((x + m - 1) // m) * m


def _ratio_loss_kernel(zs_ref, tm_ref, out_ref, zsum_ref, tsum_ref, *,
                       ratio, t_total, t_tile, mask_t):
    k = pl.program_id(1)
    last = pl.num_programs(1) - 1

    @pl.when(k == 0)
    def _():
        zsum_ref[...] = jnp.zeros_like(zsum_ref)
        tsum_ref[...] = jnp.zeros_like(tsum_ref)

    n_full = t_tile // _LANE
    tail = t_tile - n_full * _LANE   # nonzero only when t_tile == T (single T tile)
    assert tail == 0 or not mask_t

    def accumulate(masked):
        # Lane-parallel partial sums: plain VPU adds into (B_TILE, 128) f32
        # accumulators.  Cross-lane reduce is deferred to the epilogue.
        for j in range(n_full):
            zc = zs_ref[:, pl.ds(j * _LANE, _LANE)].astype(jnp.float32)
            tc = tm_ref[:, pl.ds(j * _LANE, _LANE)].astype(jnp.float32)
            if masked:
                col = (k * t_tile + j * _LANE
                       + lax.broadcasted_iota(jnp.int32, zc.shape, 1))
                valid = col < t_total
                zc = jnp.where(valid, zc, 0.0)
                tc = jnp.where(valid, tc, 0.0)
            zsum_ref[...] += zc
            tsum_ref[...] += tc
        if tail:
            # Only reachable when T_TILE == T (single tile), never masked.
            zc = zs_ref[:, pl.ds(n_full * _LANE, tail)].astype(jnp.float32)
            tc = tm_ref[:, pl.ds(n_full * _LANE, tail)].astype(jnp.float32)
            zsum_ref[:, pl.ds(0, tail)] += zc
            tsum_ref[:, pl.ds(0, tail)] += tc

    if mask_t:
        # Mask math only on the final T tile; everything else is unmasked.
        @pl.when(k < last)
        def _():
            accumulate(False)

        @pl.when(k == last)
        def _():
            accumulate(True)
    else:
        accumulate(False)

    @pl.when(k == last)
    def _():
        zrow = jnp.sum(zsum_ref[...], axis=1, keepdims=True)   # (B_TILE, 1)
        trow = jnp.sum(tsum_ref[...], axis=1, keepdims=True)
        # trow == 0 -> inf/NaN, matching the PyTorch reference.
        out_ref[...] = jnp.abs(zrow / trow - jnp.float32(ratio))


def ratio_loss(zs, z_dists, token_mask, *, ratio=1.0, b_tile=256, t_tile=None):
    """Pallas implementation of RatioLoss.forward. Returns a float32 scalar."""
    del z_dists  # unused, same as the PyTorch reference
    assert zs.ndim == 2
    B, T = zs.shape
    assert token_mask.shape == (B, T)

    zs_it = jnp.dtype(zs.dtype).itemsize
    tm_it = jnp.dtype(token_mask.dtype).itemsize
    sub = max(_sublane_multiple(zs.dtype), _sublane_multiple(token_mask.dtype))

    # ---- Batch tiling (leading "parallel" axis). ----
    # Keep at least two batch tiles when B allows, so both v7x TensorCores get
    # work.  Tiles smaller than B must be multiples of the packed-sublane
    # requirement of the narrowest input dtype.
    if B <= sub:
        B_TILE = B
    else:
        want = min(b_tile, _round_up(pl.cdiv(B, 2), sub))
        B_TILE = max(sub, (want // sub) * sub)

    # ---- Token tiling (trailing "arbitrary" reduction axis). ----
    if t_tile is None:
        T_TILE = T if T <= _T_TILE_MAX else _T_TILE_MAX
    else:
        T_TILE = T if T <= t_tile else max(_LANE, (t_tile // _LANE) * _LANE)
        T_TILE = min(T_TILE, _T_TILE_MAX)

    def resident(bt, tt):
        return 2 * bt * tt * (zs_it + tm_it)   # 2x = double-buffered inputs

    # Shrink the token tile until double-buffered input blocks fit the budget.
    while resident(B_TILE, T_TILE) > _VMEM_INPUT_BUDGET and T_TILE > _LANE:
        T_TILE = max(_LANE, (T_TILE // 2 // _LANE) * _LANE)

    mask_t = (T % T_TILE) != 0
    grid = (pl.cdiv(B, B_TILE), pl.cdiv(T, T_TILE))

    kernel = functools.partial(
        _ratio_loss_kernel,
        ratio=float(ratio), t_total=T, t_tile=T_TILE, mask_t=mask_t)

    bytes_accessed = zs.size * zs_it + token_mask.size * tm_it + B * 4
    cost = pl.CostEstimate(flops=2 * B * T + 3 * B, transcendentals=0,
                           bytes_accessed=bytes_accessed)

    example_losses = pl.pallas_call(
        kernel,
        out_shape=jax.ShapeDtypeStruct((B, 1), jnp.float32),
        grid_spec=pltpu.PrefetchScalarGridSpec(
            num_scalar_prefetch=0,
            grid=grid,
            in_specs=[
                pl.BlockSpec((B_TILE, T_TILE), lambda i, k: (i, k)),
                pl.BlockSpec((B_TILE, T_TILE), lambda i, k: (i, k)),
            ],
            out_specs=pl.BlockSpec((B_TILE, 1), lambda i, k: (i, 0)),
            scratch_shapes=[
                pltpu.VMEM((B_TILE, _LANE), jnp.float32),
                pltpu.VMEM((B_TILE, _LANE), jnp.float32),
            ],
        ),
        compiler_params=pltpu.CompilerParams(
            dimension_semantics=("parallel", "arbitrary"),
            vmem_limit_bytes=_VMEM_LIMIT_BYTES),
        cost_estimate=cost,
    )(zs, token_mask)

    # Mean over the true batch — tiny reduction over B scalars.
    return jnp.mean(example_losses)


def _ref_loss(zs, token_mask, ratio):
    zs32 = zs.astype(jnp.float32)
    tm32 = token_mask.astype(jnp.float32)
    return jnp.mean(jnp.abs(jnp.sum(zs32, axis=1) / jnp.sum(tm32, axis=1) - ratio))


if __name__ == "__main__":
    key = jax.random.PRNGKey(0)
    k1, k2, k3, k4, k5, k6, k7, k8 = jax.random.split(key, 8)

    # Case 1: small aligned shapes, single-tile grid, f32 inputs.
    B, T = 8, 128
    zs = jax.random.uniform(k1, (B, T), dtype=jnp.float32)
    tm = (jax.random.uniform(k2, (B, T)) > 0.3).astype(jnp.float32)
    tm = tm.at[:, 0].set(1.0)
    loss = jax.block_until_ready(ratio_loss(zs, None, tm, ratio=1.0))
    ref = _ref_loss(zs, tm, 1.0)
    assert jnp.allclose(loss, ref, rtol=1e-5, atol=1e-6), (loss, ref)

    # Case 2: unaligned shapes with small explicit tiles -> multi-tile
    # accumulation, last-tile-only lane mask, partial-B output rows.
    B2, T2 = 10, 300
    zs2 = jax.random.uniform(k3, (B2, T2), dtype=jnp.float32)
    tm2 = (jax.random.uniform(k4, (B2, T2)) > 0.3).astype(jnp.float32)
    tm2 = tm2.at[:, 0].set(1.0)
    loss2 = jax.block_until_ready(
        ratio_loss(zs2, None, tm2, ratio=0.5, b_tile=8, t_tile=128))
    ref2 = _ref_loss(zs2, tm2, 0.5)
    assert jnp.allclose(loss2, ref2, rtol=1e-5, atol=1e-5), (loss2, ref2)

    # Case 3: narrow native dtypes (bf16 zs + int8 mask), no host upcast.
    B3, T3 = 16, 256
    zs3 = jax.random.uniform(k5, (B3, T3), dtype=jnp.float32).astype(jnp.bfloat16)
    tm3 = (jax.random.uniform(k6, (B3, T3)) > 0.3).astype(jnp.int8)
    tm3 = tm3.at[:, 0].set(1)
    loss3 = jax.block_until_ready(ratio_loss(zs3, None, tm3, ratio=1.0))
    ref3 = _ref_loss(zs3, tm3, 1.0)
    assert jnp.allclose(loss3, ref3, rtol=1e-5, atol=1e-5), (loss3, ref3)

    # Case 4: int8 mask forces 32-row sublane alignment on a split batch axis
    # (B_TILE snaps from the requested 8 up to 32, grid[0] == 2).
    B4, T4 = 64, 384
    zs4 = jax.random.uniform(k7, (B4, T4), dtype=jnp.bfloat16)
    tm4 = (jax.random.uniform(k8, (B4, T4)) > 0.3).astype(jnp.int8)
    tm4 = tm4.at[:, 0].set(1)
    loss4 = jax.block_until_ready(ratio_loss(zs4, None, tm4, ratio=0.25, b_tile=8))
    ref4 = _ref_loss(zs4, tm4, 0.25)
    assert jnp.allclose(loss4, ref4, rtol=1e-5, atol=1e-5), (loss4, ref4)

    print("KERNEL_OK")
</pallas_src>

<mosaic_0001>
module attributes {stable_mosaic.version = 11 : i64} {
  func.func @_ratio_loss_kernel(%arg0: i32, %arg1: i32, %arg2: memref<8x128xf32, #tpu.memory_space<vmem>>, %arg3: memref<8x128xf32, #tpu.memory_space<vmem>>, %arg4: memref<8x1xf32, #tpu.memory_space<vmem>>, %arg5: memref<8x128xf32, #tpu.memory_space<vmem>>, %arg6: memref<8x128xf32, #tpu.memory_space<vmem>>) attributes {dimension_semantics = [#tpu.dimension_semantics<parallel>, #tpu.dimension_semantics<arbitrary>], iteration_bounds = array<i64: 1, 1>, scalar_prefetch = 0 : i64, scratch_operands = 2 : i64, tpu.core_type = #tpu.core_type<tc>, window_params = [{transform_indices = @transform_0, window_bounds = array<i64: 8, 128>}, {transform_indices = @transform_1, window_bounds = array<i64: 8, 128>}, {transform_indices = @transform_2, window_bounds = array<i64: 8, 1>}]} {
    %c0_i32 = arith.constant 0 : i32
    %0 = arith.cmpi eq, %arg1, %c0_i32 : i32
    %1 = arith.extui %0 : i1 to i32
    %c0_i32_0 = arith.constant 0 : i32
    %2 = arith.cmpi ne, %1, %c0_i32_0 : i32
    scf.if %2 {
      %cst = arith.constant 0.000000e+00 : f32
      %14 = vector.broadcast %cst : f32 to vector<8x128xf32>
      %c0_14 = arith.constant 0 : index
      %c0_15 = arith.constant 0 : index
      %15 = vector.load %arg5[%c0_14, %c0_15] : memref<8x128xf32, #tpu.memory_space<vmem>>, vector<8x128xf32>
      tpu.vector_store %arg5[%c0_14, %c0_15], %14 {strides = array<i32>} : memref<8x128xf32, #tpu.memory_space<vmem>>, vector<8x128xf32>,
      %cst_16 = arith.constant 0.000000e+00 : f32
      %16 = vector.broadcast %cst_16 : f32 to vector<8x128xf32>
      %c0_17 = arith.constant 0 : index
      %c0_18 = arith.constant 0 : index
      %17 = vector.load %arg6[%c0_17, %c0_18] : memref<8x128xf32, #tpu.memory_space<vmem>>, vector<8x128xf32>
      tpu.vector_store %arg6[%c0_17, %c0_18], %16 {strides = array<i32>} : memref<8x128xf32, #tpu.memory_space<vmem>>, vector<8x128xf32>,
    } else {
    }
    %c0 = arith.constant 0 : index
    %c0_1 = arith.constant 0 : index
    %3 = vector.load %arg2[%c0, %c0_1] : memref<8x128xf32, #tpu.memory_space<vmem>>, vector<8x128xf32>
    %c0_2 = arith.constant 0 : index
    %c0_3 = arith.constant 0 : index
    %4 = vector.load %arg3[%c0_2, %c0_3] : memref<8x128xf32, #tpu.memory_space<vmem>>, vector<8x128xf32>
    %c0_4 = arith.constant 0 : index
    %c0_5 = arith.constant 0 : index
    %5 = vector.load %arg5[%c0_4, %c0_5] : memref<8x128xf32, #tpu.memory_space<vmem>>, vector<8x128xf32>
    %6 = arith.addf %5, %3 : vector<8x128xf32>
    %c0_6 = arith.constant 0 : index
    %c0_7 = arith.constant 0 : index
    %7 = vector.load %arg5[%c0_6, %c0_7] : memref<8x128xf32, #tpu.memory_space<vmem>>, vector<8x128xf32>
    tpu.vector_store %arg5[%c0_6, %c0_7], %6 {strides = array<i32>} : memref<8x128xf32, #tpu.memory_space<vmem>>, vector<8x128xf32>,
    %c0_8 = arith.constant 0 : index
    %c0_9 = arith.constant 0 : index
    %8 = vector.load %arg6[%c0_8, %c0_9] : memref<8x128xf32, #tpu.memory_space<vmem>>, vector<8x128xf32>
    %9 = arith.addf %8, %4 : vector<8x128xf32>
    %c0_10 = arith.constant 0 : index
    %c0_11 = arith.constant 0 : index
    %10 = vector.load %arg6[%c0_10, %c0_11] : memref<8x128xf32, #tpu.memory_space<vmem>>, vector<8x128xf32>
    tpu.vector_store %arg6[%c0_10, %c0_11], %9 {strides = array<i32>} : memref<8x128xf32, #tpu.memory_space<vmem>>, vector<8x128xf32>,
    %c0_i32_12 = arith.constant 0 : i32
    %11 = arith.cmpi eq, %arg1, %c0_i32_12 : i32
    %12 = arith.extui %11 : i1 to i32
    %c0_i32_13 = arith.constant 0 : i32
    %13 = arith.cmpi ne, %12, %c0_i32_13 : i32
    scf.if %13 {
      %c0_14 = arith.constant 0 : index
      %c0_15 = arith.constant 0 : index
      %14 = vector.load %arg5[%c0_14, %c0_15] : memref<8x128xf32, #tpu.memory_space<vmem>>, vector<8x128xf32>
      %cst = arith.constant dense<0.000000e+00> : vector<8xf32>
      %15 = vector.multi_reduction <add>, %14, %cst [1] : vector<8x128xf32> to vector<8xf32>
      %16 = vector.shape_cast %15 : vector<8xf32> to vector<8x1xf32>
      %c0_16 = arith.constant 0 : index
      %c0_17 = arith.constant 0 : index
      %17 = vector.load %arg6[%c0_16, %c0_17] : memref<8x128xf32, #tpu.memory_space<vmem>>, vector<8x128xf32>
      %cst_18 = arith.constant dense<0.000000e+00> : vector<8xf32>
      %18 = vector.multi_reduction <add>, %17, %cst_18 [1] : vector<8x128xf32> to vector<8xf32>
      %19 = vector.shape_cast %18 : vector<8xf32> to vector<8x1xf32>
      %20 = arith.divf %16, %19 : vector<8x1xf32>
      %cst_19 = arith.constant 1.000000e+00 : f32
      %21 = vector.broadcast %cst_19 : f32 to vector<8x1xf32>
      %22 = arith.subf %20, %21 : vector<8x1xf32>
      %23 = math.absf %22 : vector<8x1xf32>
      %c0_20 = arith.constant 0 : index
      %c0_21 = arith.constant 0 : index
      %24 = vector.load %arg4[%c0_20, %c0_21] : memref<8x1xf32, #tpu.memory_space<vmem>>, vector<8x1xf32>
      tpu.vector_store %arg4[%c0_20, %c0_21], %23 {strides = array<i32>} : memref<8x1xf32, #tpu.memory_space<vmem>>, vector<8x1xf32>,
    } else {
    }
    return
  }
  func.func @transform_0(%arg0: i32, %arg1: i32) -> (i32, i32) {
    %c0_i32 = arith.constant 0 : i32
    return %arg0, %arg1 : i32, i32
  }
  func.func @transform_1(%arg0: i32, %arg1: i32) -> (i32, i32) {
    %c0_i32 = arith.constant 0 : i32
    return %arg0, %arg1 : i32, i32
  }
  func.func @transform_2(%arg0: i32, %arg1: i32) -> (i32, i32) {
    %c0_i32 = arith.constant 0 : i32
    %c0_i32_0 = arith.constant 0 : i32
    return %arg0, %c0_i32 : i32, i32
  }
}

</mosaic_0001>

<llo_original>
// kernel: tpu_custom_call.1
$region0: #{tpu_custom_call.1}
  #allocation0 [shape = 'u32[]', space=smem, size = 0x4, offset = 0x4, fixed_abs, tag = 'smem constant byte address 0x4 - core index']
  #allocation1 [shape = 'u32[144,128]{1,0:T(1,128)}', space=vmem, size = 0x12000, scoped, tag = 'internal scratch']
  #allocation2 [shape = 'f32[8,128]{1,0:T(8,128)}', space=vmem, size = 0x1000, scoped, tag = 'scratch operand']
  #allocation3 [shape = 'f32[8,128]{1,0:T(8,128)}', space=vmem, size = 0x1000, scoped, tag = 'scratch operand']
  %s0 = inlined_call_operand.hbm [shape: f32[8,128], index: 0, kind: input, shape index: {}]
  %s1 = inlined_call_operand.hbm [shape: f32[8,128], index: 1, kind: input, shape index: {}]
  %s2 = inlined_call_operand.vmem [shape: f32[8,1], index: 2, kind: output, shape index: {}]
  %s3 = sld [smem:[#allocation0]]
  $region34: #{tpu_custom_call.1} parent=0
    _
  %s5 = ssub.s32 1, %s3
  %s6 = scalar_select 0, %s5, %s3
  $region1: #{tpu_custom_call.1} parent=0
    #allocation4 [shape = 'u8[4096]{0}', space=vmem, size = 0x1000, scoped, tag = 'input window, operand 0, single buffered']
    #allocation5 [shape = 's32[1]{0}', space=sflag, size = 0x4, scoped, tag = 'scoped memory for tpu_custom_call.1']
    #allocation6 [shape = 'u8[4096]{0}', space=vmem, size = 0x1000, scoped, tag = 'input window, operand 1, single buffered']
    #allocation7 [shape = 's32[1]{0}', space=sflag, size = 0x4, scoped, tag = 'scoped memory for tpu_custom_call.1']
    %7 = vsyncpa [#allocation5], 0
    %8 = vsyncpa [#allocation7], 0
    // Predicated region
    $region2: #{tpu_custom_call.1} parent=1 // pred_check
      _
    $region3: #{tpu_custom_call.1} parent=1 // pred_check_branch
      %10 = sbr.rel (0) target = $region5
    $region4: #{tpu_custom_call.1} parent=1 // pred_region
      %s12 = ssub.s32 128, 128
      %13 = vsyncadd [#allocation5], %s12
      %s15 = sshll.u32 [#allocation4], 4
      %s16 = int_to_ptr.vmem [resolvable:$true] %s15
      %18 = dma.hbm_to_vmem [thread:$0]  %s0, 128, %s16, [#allocation5]
    $region5: #{tpu_custom_call.1} parent=1 // pred_fallthru
      _
    // Predicated region
    $region6: #{tpu_custom_call.1} parent=1 // pred_check
      _
    $region7: #{tpu_custom_call.1} parent=1 // pred_check_branch
      %20 = sbr.rel (0) target = $region9
    $region8: #{tpu_custom_call.1} parent=1 // pred_region
      %s22 = ssub.s32 128, 128
      %23 = vsyncadd [#allocation7], %s22
      %s25 = sshll.u32 [#allocation6], 4
      %s26 = int_to_ptr.vmem [resolvable:$true] %s25
      %28 = dma.hbm_to_vmem [thread:$0]  %s1, 128, %s26, [#allocation7]
    $region9: #{tpu_custom_call.1} parent=1 // pred_fallthru
      _
    // Predicated region
    $region10: #{tpu_custom_call.1} parent=1 // pred_check
      _
    $region11: #{tpu_custom_call.1} parent=1 // pred_check_branch
      %30 = sbr.rel (0) target = $region13
    $region12: #{tpu_custom_call.1} parent=1 // pred_region
      %31 = dma.done [#allocation5], 128
    $region13: #{tpu_custom_call.1} parent=1 // pred_fallthru
      _
    // Predicated region
    $region14: #{tpu_custom_call.1} parent=1 // pred_check
      _
    $region15: #{tpu_custom_call.1} parent=1 // pred_check_branch
      %33 = sbr.rel (0) target = $region17
    $region16: #{tpu_custom_call.1} parent=1 // pred_region
      %34 = dma.done [#allocation7], 128
    $region17: #{tpu_custom_call.1} parent=1 // pred_fallthru
      _
    %p35 = scmp.eq.s32.totalorder 0, 0
    // Predicated region
    $region18: #{tpu_custom_call.1} parent=1 // pred_check
      %p36 = pneg %p35
    $region19: #{tpu_custom_call.1} parent=1 // pred_check_branch
      %38 = sbr.rel (%p36) target = $region21
    $region20: #{tpu_custom_call.1} parent=1 // pred_region
      %39 = vst [vmem:[#allocation2] sm:$0xff] 0.0
      %40 = vst [vmem:[#allocation3] sm:$0xff] 0.0
    $region21: #{tpu_custom_call.1} parent=1 // pred_fallthru
      _
    %v41 = vld [vmem:[#allocation4] sm:$0xff]
    %v42 = vld [vmem:[#allocation6] sm:$0xff]
    %v43 = vld [vmem:[#allocation2] sm:$0xff]
    %v44 = vadd.f32 %v43, %v41
    %45 = vst [vmem:[#allocation2] sm:$0xff] %v44
    %v46 = vld [vmem:[#allocation3] sm:$0xff]
    %v47 = vadd.f32 %v46, %v42
    %48 = vst [vmem:[#allocation3] sm:$0xff] %v47
    // Predicated region
    $region22: #{tpu_custom_call.1} parent=1 // pred_check
      %p49 = pneg %p35
    $region23: #{tpu_custom_call.1} parent=1 // pred_check_branch
      %51 = sbr.rel (%p49) target = $region25
    $region24: #{tpu_custom_call.1} parent=1 // pred_region
      %v52 = vld [vmem:[#allocation2] sm:$0xff]
      %53 = vadd.xlane.f32.xlu0 %v52
      %v54 = vpop.xlane.xlu0 %53
      %v55 = vld [vmem:[#allocation3] sm:$0xff]
      %56 = vadd.xlane.f32.xlu0 %v55
      %v57 = vpop.xlane.xlu0 %56
      %v58 = vrcp.pop %v57
      %v59 = vmul.f32 %v54, %v58
      %v60 = vsub.f32 %v59, 1.0
      %v61 = vand.u32 2147483647, %v60
      %vm62 = vcmask 7168
      %63 = vst.msk [vmem:[%s2] sm:$0xff] %vm62, %v61
    $region25: #{tpu_custom_call.1} parent=1 // pred_fallthru
      _
    // Predicated region
    $region26: #{tpu_custom_call.1} parent=1 // pred_check
      _
    $region27: #{tpu_custom_call.1} parent=1 // pred_check_branch
      %65 = sbr.rel (0) target = $region29
    $region28: #{tpu_custom_call.1} parent=1 // pred_region
      _
    $region29: #{tpu_custom_call.1} parent=1 // pred_fallthru
      _
    // Predicated region
    $region30: #{tpu_custom_call.1} parent=1 // pred_check
      _
    $region31: #{tpu_custom_call.1} parent=1 // pred_check_branch
      %67 = sbr.rel (0) target = $region33
    $region32: #{tpu_custom_call.1} parent=1 // pred_region
      _
    $region33: #{tpu_custom_call.1} parent=1 // pred_fallthru
      _
    %68 = vsyncpa [#allocation5], 1
    %69 = vsyncpa [#allocation7], 1

</llo_original>
